<compile_context>
chip_gen: v7x
topology: tpu7x:2x2x1
jax: 0.10.0
libtpu: 0.0.40
codegen_flags: <defaults>
</compile_context>

<pallas_src>
import jax
import jax.numpy as jnp
from jax.experimental import pallas as pl
from jax.experimental.pallas import tpu as pltpu

PLAN = [32, 32]  # hidden-layer widths (undefined global in the original file)

_DEFAULT_BATCH_TILE = 2048  # lane-dense; tiny VMEM footprint on all generations


def _round_up(n, m):
    return ((n + m - 1) // m) * m


def _affine_softplus_kernel(w_ref, b_ref, x_ref, o_ref):
    """out = softplus(W_eff @ x + b_eff) for one batch tile.

    w_ref: (z_dim, in_dim)   constant across the grid (VMEM-resident)
    b_ref: (z_dim, 1)        constant across the grid (VMEM-resident)
    x_ref: (in_dim, batch_tile)
    o_ref: (z_dim, batch_tile)
    """
    y = jnp.dot(w_ref[...], x_ref[...], preferred_element_type=jnp.float32)
    y = y + b_ref[...]                       # bias broadcasts over the lane axis
    o_ref[...] = jnp.logaddexp(y, 0.0).astype(o_ref.dtype)   # stable Softplus


def stochastic_recognition_forward(x, params, key, *, batch_tile=None):
    """x: (input_dim, batch) -> (z_dim, batch)."""
    in_dim, batch = x.shape
    z_dim = params[-1][0].shape[0]

    # --- Reparameterization + layer collapse (tiny; stays in plain JAX/XLA). ---
    # eps drawn here so the random stream matches reference_forward() exactly.
    w_eff = None
    b_eff = None
    for (w_mean, w_logvar, b_mean, b_logvar) in params:
        key, kw, kb = jax.random.split(key, 3)
        eps_w = jax.random.normal(kw, w_mean.shape, jnp.float32)
        eps_b = jax.random.normal(kb, b_mean.shape, jnp.float32)
        w = w_mean + eps_w * jnp.exp(0.5 * w_logvar)
        b = b_mean + eps_b * jnp.exp(0.5 * b_logvar)
        if w_eff is None:
            w_eff, b_eff = w, b
        else:
            w_eff = w @ w_eff
            b_eff = w @ b_eff + b
    b_eff = b_eff.reshape(z_dim, 1)

    # --- Lane-dense batch tiling (no host-side pad / slice). ---
    if batch_tile is None:
        batch_tile = _DEFAULT_BATCH_TILE
    batch_tile = min(batch_tile, batch)
    if batch_tile != batch and batch_tile % 128 != 0:
        # block last-dim must be a multiple of 128 unless it equals the full dim
        batch_tile = min(_round_up(batch_tile, 128), batch)
    num_tiles = pl.cdiv(batch, batch_tile)

    out = pl.pallas_call(
        _affine_softplus_kernel,
        out_shape=jax.ShapeDtypeStruct((z_dim, batch), jnp.float32),
        grid_spec=pltpu.PrefetchScalarGridSpec(
            num_scalar_prefetch=0,
            grid=(num_tiles,),
            in_specs=[
                # Constant index_maps: DMA'd once, VMEM-resident for all tiles.
                pl.BlockSpec((z_dim, in_dim), lambda i: (0, 0)),
                pl.BlockSpec((z_dim, 1), lambda i: (0, 0)),
                pl.BlockSpec((in_dim, batch_tile), lambda i: (0, i)),
            ],
            out_specs=pl.BlockSpec((z_dim, batch_tile), lambda i: (0, i)),
        ),
        compiler_params=pltpu.CompilerParams(
            dimension_semantics=("parallel",)),   # independent tiles (v7x megacore)
    )(w_eff, b_eff, x)
    return out


def init_params(key, input_dim, z_dim, user_input_logvar=-2.5):
    """Deterministic parameter init mirroring initialize_parameters()."""
    dims = [input_dim] + PLAN + [z_dim]
    params = []
    for i in range(len(dims) - 1):
        fan_in, fan_out = dims[i], dims[i + 1]
        key, sub = jax.random.split(key)
        # kaiming_normal_ (fan_in, relu): std = sqrt(2 / fan_in)
        w_mean = jax.random.normal(sub, (fan_out, fan_in), jnp.float32) * jnp.sqrt(
            2.0 / fan_in)
        w_logvar = jnp.full((fan_out, fan_in), user_input_logvar, jnp.float32)
        b_mean = jnp.zeros((fan_out,), jnp.float32)
        b_logvar = jnp.full((fan_out,), user_input_logvar, jnp.float32)
        params.append((w_mean, w_logvar, b_mean, b_logvar))
    return params


def reference_forward(x, params, key):
    """Pure-JAX layered reference with the exact same eps draws."""
    n_layers = len(params)
    for i, (w_mean, w_logvar, b_mean, b_logvar) in enumerate(params):
        key, kw, kb = jax.random.split(key, 3)
        eps_w = jax.random.normal(kw, w_mean.shape, jnp.float32)
        eps_b = jax.random.normal(kb, b_mean.shape, jnp.float32)
        w = w_mean + eps_w * jnp.exp(0.5 * w_logvar)
        b = b_mean + eps_b * jnp.exp(0.5 * b_logvar)
        x = w @ x + b[:, None]
        if i == n_layers - 1:
            x = jnp.logaddexp(x, 0.0)
    return x


if __name__ == "__main__":
    input_dim, z_dim = 16, 8
    root = jax.random.PRNGKey(0)
    k_params, k_x, k_eps = jax.random.split(root, 3)
    params = init_params(k_params, input_dim, z_dim)

    # Small example: batch=8, single full-extent tile.
    batch = 8
    x = jax.random.normal(k_x, (input_dim, batch), jnp.float32)  # (features, batch)
    out = jax.block_until_ready(stochastic_recognition_forward(x, params, k_eps))
    ref = reference_forward(x, params, k_eps)
    assert out.shape == (z_dim, batch)
    assert jnp.allclose(out, ref, atol=1e-4, rtol=1e-4)

    # Exercise the multi-tile + ragged-last-tile path (no host pad / slice).
    batch2 = 300
    x2 = jax.random.normal(k_x, (input_dim, batch2), jnp.float32)
    out2 = jax.block_until_ready(
        stochastic_recognition_forward(x2, params, k_eps, batch_tile=128))
    ref2 = reference_forward(x2, params, k_eps)
    assert out2.shape == (z_dim, batch2)
    assert jnp.allclose(out2, ref2, atol=1e-4, rtol=1e-4)

    print("KERNEL_OK")
</pallas_src>

<mosaic_0001>
module attributes {stable_mosaic.version = 11 : i64} {
  func.func @_affine_softplus_kernel(%arg0: i32, %arg1: memref<8x16xf32, #tpu.memory_space<vmem>>, %arg2: memref<8x1xf32, #tpu.memory_space<vmem>>, %arg3: memref<16x8xf32, #tpu.memory_space<vmem>>, %arg4: memref<8x8xf32, #tpu.memory_space<vmem>>) attributes {dimension_semantics = [#tpu.dimension_semantics<parallel>], iteration_bounds = array<i64: 1>, scalar_prefetch = 0 : i64, scratch_operands = 0 : i64, tpu.core_type = #tpu.core_type<tc>, window_params = [{pipeline_mode = #tpu.pipeline_mode<synchronous>, transform_indices = @transform_0, window_bounds = array<i64: 8, 16>}, {pipeline_mode = #tpu.pipeline_mode<synchronous>, transform_indices = @transform_1, window_bounds = array<i64: 8, 1>}, {transform_indices = @transform_2, window_bounds = array<i64: 16, 8>}, {transform_indices = @transform_3, window_bounds = array<i64: 8, 8>}]} {
    %c0 = arith.constant 0 : index
    %c0_0 = arith.constant 0 : index
    %0 = vector.load %arg1[%c0, %c0_0] : memref<8x16xf32, #tpu.memory_space<vmem>>, vector<8x16xf32>
    %c0_1 = arith.constant 0 : index
    %c0_2 = arith.constant 0 : index
    %1 = vector.load %arg3[%c0_1, %c0_2] : memref<16x8xf32, #tpu.memory_space<vmem>>, vector<16x8xf32>
    %cst = arith.constant dense<0.000000e+00> : vector<8x8xf32>
    %2 = tpu.matmul %0, %1, %cst {dimension_numbers = #tpu.dot_dimension_numbers<[1], [0], [0], [1], [0, 0, 1, 1], [], []>} : vector<8x16xf32>, vector<16x8xf32>, vector<8x8xf32> -> vector<8x8xf32>
    %c0_3 = arith.constant 0 : index
    %c0_4 = arith.constant 0 : index
    %3 = vector.load %arg2[%c0_3, %c0_4] : memref<8x1xf32, #tpu.memory_space<vmem>>, vector<8x1xf32>
    %4 = vector.broadcast %3 : vector<8x1xf32> to vector<8x8xf32>
    %5 = arith.addf %2, %4 : vector<8x8xf32>
    %cst_5 = arith.constant 0.000000e+00 : f32
    %6 = vector.broadcast %cst_5 : f32 to vector<8x8xf32>
    %7 = arith.maximumf %5, %6 : vector<8x8xf32>
    %8 = vector.broadcast %cst_5 : f32 to vector<8x8xf32>
    %9 = arith.subf %5, %8 : vector<8x8xf32>
    %10 = arith.cmpf one, %9, %9 : vector<8x8xf32>
    %11 = vector.broadcast %cst_5 : f32 to vector<8x8xf32>
    %12 = arith.addf %5, %11 : vector<8x8xf32>
    %13 = math.absf %9 : vector<8x8xf32>
    %cst_6 = arith.constant 0.000000e+00 : f32
    %14 = vector.broadcast %cst_6 : f32 to vector<8x8xf32>
    %15 = arith.subf %14, %13 : vector<8x8xf32>
    %16 = math.exp %15 : vector<8x8xf32>
    %17 = math.log1p %16 : vector<8x8xf32>
    %18 = arith.addf %7, %17 : vector<8x8xf32>
    %19 = arith.select %10, %12, %18 : vector<8x8xi1>, vector<8x8xf32>
    %c0_7 = arith.constant 0 : index
    %c0_8 = arith.constant 0 : index
    %20 = vector.load %arg4[%c0_7, %c0_8] : memref<8x8xf32, #tpu.memory_space<vmem>>, vector<8x8xf32>
    tpu.vector_store %arg4[%c0_7, %c0_8], %19 {strides = array<i32>} : memref<8x8xf32, #tpu.memory_space<vmem>>, vector<8x8xf32>,
    return
  }
  func.func @transform_0(%arg0: i32) -> (i32, i32) {
    %c0_i32 = arith.constant 0 : i32
    %c0_i32_0 = arith.constant 0 : i32
    %c0_i32_1 = arith.constant 0 : i32
    return %c0_i32, %c0_i32_0 : i32, i32
  }
  func.func @transform_1(%arg0: i32) -> (i32, i32) {
    %c0_i32 = arith.constant 0 : i32
    %c0_i32_0 = arith.constant 0 : i32
    %c0_i32_1 = arith.constant 0 : i32
    return %c0_i32, %c0_i32_0 : i32, i32
  }
  func.func @transform_2(%arg0: i32) -> (i32, i32) {
    %c0_i32 = arith.constant 0 : i32
    %c0_i32_0 = arith.constant 0 : i32
    return %c0_i32, %arg0 : i32, i32
  }
  func.func @transform_3(%arg0: i32) -> (i32, i32) {
    %c0_i32 = arith.constant 0 : i32
    %c0_i32_0 = arith.constant 0 : i32
    return %c0_i32, %arg0 : i32, i32
  }
}

</mosaic_0001>

<llo_original>
// kernel: tpu_custom_call.1
$region0: #{tpu_custom_call.1}
  #allocation0 [shape = 'u32[]', space=smem, size = 0x4, offset = 0x4, fixed_abs, tag = 'smem constant byte address 0x4 - core index']
  #allocation1 [shape = 'u32[144,128]{1,0:T(1,128)}', space=vmem, size = 0x12000, scoped, tag = 'internal scratch']
  %s0 = inlined_call_operand.vmem [shape: f32[8,16], index: 0, kind: input, shape index: {}]
  %s1 = inlined_call_operand.vmem [shape: f32[8,1], index: 1, kind: input, shape index: {}]
  %s2 = inlined_call_operand.vmem [shape: f32[16,8], index: 2, kind: input, shape index: {}]
  %s3 = inlined_call_operand.hbm [shape: f32[8,8], index: 3, kind: output, shape index: {}]
  %s4 = sld [smem:[#allocation0]]
  $region22: #{tpu_custom_call.1} parent=0
    _
  %s6 = ssub.s32 1, %s4
  %s7 = scalar_select 0, %s6, %s4
  $region1: #{tpu_custom_call.1} parent=0
    #allocation2 [shape = 'u8[4096]{0}', space=vmem, size = 0x1000, scoped, tag = 'output window, operand 0, single buffered']
    #allocation3 [shape = 's32[1]{0}', space=sflag, size = 0x4, scoped, tag = 'scoped memory for tpu_custom_call.1']
    %8 = vsyncpa [#allocation3], 0
    // Predicated region
    $region2: #{tpu_custom_call.1} parent=1 // pred_check
      _
    $region3: #{tpu_custom_call.1} parent=1 // pred_check_branch
      %10 = sbr.rel (0) target = $region5
    $region4: #{tpu_custom_call.1} parent=1 // pred_region
      _
    $region5: #{tpu_custom_call.1} parent=1 // pred_fallthru
      _
    // Predicated region
    $region6: #{tpu_custom_call.1} parent=1 // pred_check
      _
    $region7: #{tpu_custom_call.1} parent=1 // pred_check_branch
      %12 = sbr.rel (0) target = $region9
    $region8: #{tpu_custom_call.1} parent=1 // pred_region
      _
    $region9: #{tpu_custom_call.1} parent=1 // pred_fallthru
      _
    // Predicated region
    $region10: #{tpu_custom_call.1} parent=1 // pred_check
      _
    $region11: #{tpu_custom_call.1} parent=1 // pred_check_branch
      %14 = sbr.rel (0) target = $region13
    $region12: #{tpu_custom_call.1} parent=1 // pred_region
      _
    $region13: #{tpu_custom_call.1} parent=1 // pred_fallthru
      _
    %v15 = vld [vmem:[%s0] sm:$0xff]
    %v16 = vld [vmem:[%s2] sm:$0xff]
    %v17 = vld [vmem:[%s2 + $0x8] sm:$0xff]
    %v18 = vld [vmem:[%s1] sm:$0xff]
    %20 = vset.pattern.permute.xlu0 0
    %21 = vperm.xlu0 %20, %v18
    %v22 = vpop.permute.xlu0 %21
    %vm24 = vcmask 130048
    %v26 = vsel %vm24, %v15, 0
    %28 = vmatprep.subr.mxu0 0.0
    %29 = vmatpush1.msra.mxu0 %v16
    %30 = vmatprep.subr.mxu0 0.0
    %31 = vmatpush1.msra.mxu0 %v17
    %32 = vmatprep.subr.mxu0 0.0
    %33 = vmatpush1.msra.mxu0 0.0
    %34 = vmatprep.subr.mxu0 0.0
    %35 = vmatpush1.msra.mxu0 0.0
    %36 = vmatprep.subr.mxu0 0.0
    %37 = vmatpush1.msra.mxu0 0.0
    %38 = vmatprep.subr.mxu0 0.0
    %39 = vmatpush1.msra.mxu0 0.0
    %40 = vmatprep.subr.mxu0 0.0
    %41 = vmatpush1.msra.mxu0 0.0
    %42 = vmatprep.subr.mxu0 0.0
    %43 = vmatpush1.msra.mxu0 0.0
    %44 = vmatprep.subr.mxu0 0.0
    %45 = vmatpush1.msra.mxu0 0.0
    %46 = vmatprep.subr.mxu0 0.0
    %47 = vmatpush1.msra.mxu0 0.0
    %48 = vmatprep.subr.mxu0 0.0
    %49 = vmatpush1.msra.mxu0 0.0
    %50 = vmatprep.subr.mxu0 0.0
    %51 = vmatpush1.msra.mxu0 0.0
    %52 = vmatprep.subr.mxu0 0.0
    %53 = vmatpush1.msra.mxu0 0.0
    %54 = vmatprep.subr.mxu0 0.0
    %55 = vmatpush1.msra.mxu0 0.0
    %56 = vmatprep.subr.mxu0 0.0
    %57 = vmatpush1.msra.mxu0 0.0
    %58 = vmatprep.subr.mxu0 0.0
    %59 = vmatpush1.msra.mxu0 0.0
    %60 = vmatprep.subr.mxu0 0.0
    %61 = vmatpush1.msra.mxu0 0.0
    %62 = vmatprep.subr.mxu0 0.0
    %63 = vmatpush1.msra.mxu0 0.0
    %64 = vmatprep.subr.mxu0 0.0
    %65 = vmatpush1.msra.mxu0 0.0
    %66 = vmatprep.subr.mxu0 0.0
    %67 = vmatpush1.msra.mxu0 0.0
    %68 = vmatprep.subr.mxu0 0.0
    %69 = vmatpush1.msra.mxu0 0.0
    %70 = vmatprep.subr.mxu0 0.0
    %71 = vmatpush1.msra.mxu0 0.0
    %72 = vmatprep.subr.mxu0 0.0
    %73 = vmatpush1.msra.mxu0 0.0
    %74 = vmatprep.subr.mxu0 0.0
    %75 = vmatpush1.msra.mxu0 0.0
    %76 = vmatprep.subr.mxu0 0.0
    %77 = vmatpush1.msra.mxu0 0.0
    %78 = vmatprep.subr.mxu0 0.0
    %79 = vmatpush1.msra.mxu0 0.0
    %80 = vmatprep.subr.mxu0 0.0
    %81 = vmatpush1.msra.mxu0 0.0
    %82 = vmatprep.subr.mxu0 0.0
    %83 = vmatpush1.msra.mxu0 0.0
    %84 = vmatprep.subr.mxu0 0.0
    %85 = vmatpush1.msra.mxu0 0.0
    %86 = vmatprep.subr.mxu0 0.0
    %87 = vmatpush1.msra.mxu0 0.0
    %88 = vmatprep.subr.mxu0 0.0
    %89 = vmatpush1.msra.mxu0 0.0
    %90 = vmatprep.subr.mxu0 0.0
    %91 = vmatpush1.msra.mxu0 0.0
    %92 = vmatprep.mubr.f32.mxu0 0.0
    %93 = vmatmul.mubr.f32.gmra.mrb[0].mxu0 %v26
    %v94 = vpop.f32.mrb[0].mxu0
    %v95 = vadd.f32 %v22, %v94
    %v96 = vpop.f32.mrb[0].mxu0
    %97 = vdwg.mxu0
    %v98 = vmax.f32 %v95, 0.0
    %vm99 = vcmp.ne.f32.partialorder %v95, %v95
    %v100 = vadd.f32 %v95, 0.0
    %v101 = vand.u32 2147483647, %v95
    %v102 = vsub.f32 0.0, %v101
    %v103 = vmul.f32 %v102, 1.442695
    %v104 = vpow.pop %v103
    %v105 = vadd.f32 %v104, 1.0
    %v106 = vlog2.pop %v105
    %v107 = vmul.f32 %v106, 0.6931472
    %v108 = vmul.f32 -0.5, %v104
    %v109 = vadd.f32 %v108, 1.0
    %v110 = vmul.f32 %v109, %v104
    %v111 = vand.u32 2147483647, %v104
    %vm112 = vcmp.lt.f32.partialorder %v111, 0.0004427343
    %v113 = vsel %vm112, %v110, %v107
    %v114 = vadd.f32 %v98, %v113
    %v115 = vsel %vm99, %v100, %v114
    %vm116 = vcmask 64512
    %117 = vst.msk [vmem:[#allocation2] sm:$0xff] %vm116, %v115
    // Predicated region
    $region14: #{tpu_custom_call.1} parent=1 // pred_check
      _
    $region15: #{tpu_custom_call.1} parent=1 // pred_check_branch
      %119 = sbr.rel (0) target = $region17
    $region16: #{tpu_custom_call.1} parent=1 // pred_region
      %s121 = ssub.s32 128, 128
      %122 = vsyncadd [#allocation3], %s121
      %s124 = sshll.u32 [#allocation2], 4
      %s125 = int_to_ptr.vmem [resolvable:$true] %s124
      %127 = dma.vmem_to_hbm [thread:$0]  %s125, 128, %s3, [#allocation3]
    $region17: #{tpu_custom_call.1} parent=1 // pred_fallthru
      _
    // Predicated region
    $region18: #{tpu_custom_call.1} parent=1 // pred_check
      _
    $region19: #{tpu_custom_call.1} parent=1 // pred_check_branch
      %129 = sbr.rel (0) target = $region21
    $region20: #{tpu_custom_call.1} parent=1 // pred_region
      %130 = dma.done [#allocation3], 128
    $region21: #{tpu_custom_call.1} parent=1 // pred_fallthru
      _
    %131 = vsyncpa [#allocation3], 1

</llo_original>
